<compile_context>
chip_gen: v6e
topology: v6e:2x2x1
jax: 0.10.0
libtpu: 0.0.40
codegen_flags: <defaults>
</compile_context>

<pallas_src>
import functools
import math

import jax
import jax.numpy as jnp
from jax.experimental import pallas as pl
from jax.experimental.pallas import tpu as pltpu


def _round_up(v, m):
    return (v + m - 1) // m * m


def _conv_taps(k, Wq):
    """tap index t = kh*k+kw -> (phase index, lane shift) in the stride-2 phase split."""
    taps = {}
    for kh in range(k):
        for kw in range(k):
            p = (kh % 2) * 2 + (kw % 2)
            sh = (kh // 2) * Wq + (kw // 2)
            taps[(p, sh)] = kh * k + kw
    return taps


def _pool_taps(P, Wq):
    """the 16 (phase, lane shift) taps of the 4x4 / stride-2 / pad-1 pooling window."""
    base = P - 1
    taps = []
    for r in range(4):
        for t in range(4):
            R, T = base + r, base + t
            taps.append(((R % 2) * 2 + (T % 2), (R // 2) * Wq + (T // 2)))
    return taps


# ---------------------------------------------------------------------------
# Kernel: fused conv(+BN+SiLU) + avgpool + maxpool + branch combine, per image
# ---------------------------------------------------------------------------
def _esd_kernel(xq_ref, neg_ref, w_ref, bias_ref, out_ref, col_ref, *,
                k, P, C1, C2, Wq, S_out, same_ch):
    f32 = jnp.float32
    conv = _conv_taps(k, Wq)            # trace-time Python dicts/lists
    pool = _pool_taps(P, Wq)
    pool_set = set(pool)
    uniq = sorted(set(conv) | pool_set)

    # ---- one pass over the unique lane-shifted slices -----------------------
    # Each slice is read straight from the ref (no full-phase load), written
    # once into the bf16 im2col scratch (conv taps) and cast to f32 once for
    # the avg-sum / masked-max accumulators (pool taps).
    s_acc = None
    m_acc = None
    for (p, sh) in uniq:
        xs = xq_ref[0, p, :, sh:sh + S_out]                 # (C1, S_out) bf16
        t = conv.get((p, sh))
        if t is not None:
            col_ref[t * C1:(t + 1) * C1, :] = xs            # im2col row block
        if (p, sh) in pool_set:
            xf = xs.astype(f32)
            s_acc = xf if s_acc is None else s_acc + xf
            masked = xf + neg_ref[p, :, sh:sh + S_out]      # -1e30 outside HxW
            m_acc = masked if m_acc is None else jnp.maximum(m_acc, masked)
    avg = s_acc * (1.0 / 16.0)          # count_include_pad=True -> always /16

    # ---- dense path: ONE MXU matmul over the stacked k*k*C1 contraction -----
    y = jnp.dot(w_ref[...], col_ref[...], preferred_element_type=f32)
    y = y + bias_ref[...]                                   # folded BN bias
    # SiLU = y * sigmoid(y); exp and approx reciprocal both run on the EUP.
    dense = y * pl.reciprocal(1.0 + jnp.exp(-y), approx=True)

    # ---- combine: single unmasked lane/sublane-dense store -------------------
    if same_ch:                         # c2 == c1: global + local + dense
        out_ref[0] = (dense + avg + m_acc).astype(out_ref.dtype)
    else:                               # c2 == 2*c1: cat(global, local) + dense
        extra = jnp.concatenate([avg, m_acc], axis=0)       # (C2, S_out)
        out_ref[0] = (dense + extra).astype(out_ref.dtype)


# ---------------------------------------------------------------------------
# Wrapper
# ---------------------------------------------------------------------------
def esd_forward(x, conv_weight, bn_gamma, bn_beta, bn_mean, bn_var,
                *, k=3, eps=1e-5):
    """ESD forward (eval-mode BatchNorm).  x: (N, C1, H, W) NCHW; stride fixed at 2."""
    N, C1, H, W = x.shape
    C2 = conv_weight.shape[0]
    assert k % 2 == 1 and k >= 3, "ESD conv kernel must be odd and >= 3"
    assert H % 2 == 0 and W % 2 == 0, "even spatial dims required (stride 2)"
    same_ch = (C2 == C1)
    if not same_ch:
        assert C2 == 2 * C1, "ESD concat branch requires c2 == 2*c1"

    P = k // 2                          # conv pad (>=1, also covers pool pad of 1)
    Ho, Wo = H // 2, W // 2
    Hph, Wq = Ho + P, Wo + P            # per-phase rows / cols
    Sq = Hph * Wq
    S_out = _round_up(Ho * Wq, 128)     # lane-dense kernel output width
    max_shift = max(P, (P + 2) // 2) * (Wq + 1)
    Sq_pad = _round_up(S_out + max_shift, 128)

    # --- stride-2 phase split of the zero-padded input (~1x the bytes of x) ---
    xpad = jnp.pad(x, ((0, 0), (0, 0), (P, P), (P, P)))
    phases = [xpad[:, :, pi::2, pj::2] for pi in (0, 1) for pj in (0, 1)]
    xq = jnp.stack(phases, axis=1).reshape(N, 4, C1, Sq)
    xq = jnp.pad(xq, ((0, 0), (0, 0), (0, 0), (0, Sq_pad - Sq)))
    xq = xq.astype(jnp.bfloat16)        # bf16 MXU operand / halved DMA
    # NOTE: pools therefore see bf16-rounded activations (reference matches);
    # keep an f32 copy of the phases if exact torch pooling fidelity is needed.

    # --- -inf-padding sentinel for the max pool (per phase, broadcast over C) -
    negs = []
    for pi in (0, 1):
        for pj in (0, 1):
            rows = 2 * jnp.arange(Hph) + pi
            cols = 2 * jnp.arange(Wq) + pj
            valid = (((rows >= P) & (rows < P + H))[:, None] &
                     ((cols >= P) & (cols < P + W))[None, :])
            negs.append(jnp.where(valid, 0.0, -1e30).astype(jnp.float32))
    neg = jnp.stack(negs, axis=0).reshape(4, 1, Sq)
    neg = jnp.pad(neg, ((0, 0), (0, 0), (0, Sq_pad - Sq)), constant_values=-1e30)

    # --- fold eval-mode BN into the conv weight + a per-channel bias ----------
    # Weight is laid out (C2, k*k*C1) tap-major so the conv is a single matmul
    # against the in-kernel im2col scratch.
    scale = bn_gamma / jnp.sqrt(bn_var + eps)
    bias = (bn_beta - bn_mean * scale).astype(jnp.float32).reshape(C2, 1)
    w_fold = conv_weight * scale[:, None, None, None]            # (C2, C1, k, k)
    w2d = jnp.transpose(w_fold, (0, 2, 3, 1)).reshape(C2, k * k * C1)
    w2d = w2d.astype(jnp.bfloat16)

    kernel = functools.partial(_esd_kernel, k=k, P=P, C1=C1, C2=C2, Wq=Wq,
                               S_out=S_out, same_ch=same_ch)

    flops = 2 * N * C2 * (k * k * C1) * S_out + 3 * N * 16 * C1 * S_out
    bytes_accessed = (xq.size * 2 + neg.size * 4 + w2d.size * 2 +
                      bias.size * 4 + N * C2 * S_out * x.dtype.itemsize)

    # Generation-aware VMEM limit: 48 MiB on v5e/v6e (128 MiB physical), but
    # only half of VMEM on v7x (64 MiB per TensorCore).
    try:
        vmem_cap = int(pltpu.get_tpu_info().vmem_capacity_bytes)
    except Exception:
        vmem_cap = 128 * 1024 * 1024
    vmem_limit = min(48 * 1024 * 1024, max(vmem_cap // 2, 8 * 1024 * 1024))

    out = pl.pallas_call(
        kernel,
        out_shape=jax.ShapeDtypeStruct((N, C2, S_out), x.dtype),
        grid_spec=pltpu.PrefetchScalarGridSpec(
            num_scalar_prefetch=0,
            grid=(N,),
            in_specs=[
                pl.BlockSpec((1, 4, C1, Sq_pad), lambda n: (n, 0, 0, 0)),
                pl.BlockSpec((4, 1, Sq_pad), lambda n: (0, 0, 0)),
                pl.BlockSpec((C2, k * k * C1), lambda n: (0, 0)),
                pl.BlockSpec((C2, 1), lambda n: (0, 0)),
            ],
            out_specs=pl.BlockSpec((1, C2, S_out), lambda n: (n, 0, 0)),
            scratch_shapes=[pltpu.VMEM((k * k * C1, S_out), jnp.bfloat16)],
        ),
        compiler_params=pltpu.CompilerParams(
            dimension_semantics=("parallel",),
            vmem_limit_bytes=int(vmem_limit)),
        cost_estimate=pl.CostEstimate(flops=int(flops),
                                      transcendentals=int(N * C2 * S_out),
                                      bytes_accessed=int(bytes_accessed)),
    )(xq, neg, w2d, bias)

    # (N, C2, S_out) -> crop lane padding and the Wq->Wo gap columns -> NCHW.
    out = out[:, :, :Ho * Wq].reshape(N, C2, Ho, Wq)[:, :, :, :Wo]
    return out


# ---------------------------------------------------------------------------
# Pure-JAX reference (same bf16-rounded operands the kernel consumes)
# ---------------------------------------------------------------------------
def _reference(x, conv_weight, bn_gamma, bn_beta, bn_mean, bn_var, k=3, eps=1e-5):
    N, C1, H, W = x.shape
    C2 = conv_weight.shape[0]
    P = k // 2
    scale = bn_gamma / jnp.sqrt(bn_var + eps)
    bias = bn_beta - bn_mean * scale
    xb = x.astype(jnp.bfloat16).astype(jnp.float32)
    wb = (conv_weight * scale[:, None, None, None]).astype(jnp.bfloat16).astype(jnp.float32)
    y = jax.lax.conv_general_dilated(xb, wb, (2, 2), [(P, P), (P, P)],
                                     dimension_numbers=("NCHW", "OIHW", "NCHW"))
    y = y + bias[None, :, None, None]
    dense = y * jax.nn.sigmoid(y)
    dims, strides = (1, 1, 4, 4), (1, 1, 2, 2)
    pad = [(0, 0), (0, 0), (1, 1), (1, 1)]
    avg = jax.lax.reduce_window(xb, 0.0, jax.lax.add, dims, strides, pad) / 16.0
    mx = jax.lax.reduce_window(xb, -jnp.inf, jax.lax.max, dims, strides, pad)
    if C2 == C1:
        return avg + mx + dense
    return jnp.concatenate([avg, mx], axis=1) + dense


if __name__ == "__main__":
    def run_case(c1, c2, N=2, H=16, W=16, k=3):
        keys = jax.random.split(jax.random.fold_in(jax.random.PRNGKey(0), c2), 6)
        x = jax.random.normal(keys[0], (N, c1, H, W), jnp.float32)
        w = jax.random.normal(keys[1], (c2, c1, k, k), jnp.float32) / math.sqrt(c1 * k * k)
        gamma = 1.0 + 0.1 * jax.random.normal(keys[2], (c2,), jnp.float32)
        beta = 0.1 * jax.random.normal(keys[3], (c2,), jnp.float32)
        mean = 0.05 * jax.random.normal(keys[4], (c2,), jnp.float32)
        var = 1.0 + 0.1 * jax.random.uniform(keys[5], (c2,), jnp.float32)

        out = jax.block_until_ready(esd_forward(x, w, gamma, beta, mean, var, k=k))
        ref = _reference(x, w, gamma, beta, mean, var, k=k)
        assert out.shape == (N, c2, H // 2, W // 2), out.shape
        err = float(jnp.max(jnp.abs(out - ref)))
        assert jnp.allclose(out, ref, atol=2e-2, rtol=2e-2), err

    # ESD(c1=4, c2=8): concat(avgpool, maxpool) + dense branch
    run_case(4, 8)
    # ESD(c1=4, c2=4): avgpool + maxpool + dense branch
    run_case(4, 4)
    print("KERNEL_OK")
</pallas_src>

<mosaic_0001>
module attributes {stable_mosaic.version = 11 : i64} {
  func.func @_esd_kernel(%arg0: i32, %arg1: memref<1x4x4x256xbf16, #tpu.memory_space<vmem>>, %arg2: memref<4x1x256xf32, #tpu.memory_space<vmem>>, %arg3: memref<8x36xbf16, #tpu.memory_space<vmem>>, %arg4: memref<8x1xf32, #tpu.memory_space<vmem>>, %arg5: memref<1x8x128xf32, #tpu.memory_space<vmem>>, %arg6: memref<36x128xbf16, #tpu.memory_space<vmem>>) attributes {dimension_semantics = [#tpu.dimension_semantics<parallel>], iteration_bounds = array<i64: 2>, scalar_prefetch = 0 : i64, scratch_operands = 1 : i64, tpu.core_type = #tpu.core_type<tc>, window_params = [{transform_indices = @transform_0, window_bounds = array<i64: 1, 4, 4, 256>}, {pipeline_mode = #tpu.pipeline_mode<synchronous>, transform_indices = @transform_1, window_bounds = array<i64: 4, 1, 256>}, {pipeline_mode = #tpu.pipeline_mode<synchronous>, transform_indices = @transform_2, window_bounds = array<i64: 8, 36>}, {pipeline_mode = #tpu.pipeline_mode<synchronous>, transform_indices = @transform_3, window_bounds = array<i64: 8, 1>}, {transform_indices = @transform_4, window_bounds = array<i64: 1, 8, 128>}]} {
    %c0 = arith.constant 0 : index
    %c0_0 = arith.constant 0 : index
    %c0_1 = arith.constant 0 : index
    %c0_2 = arith.constant 0 : index
    %0 = vector.load %arg1[%c0, %c0_0, %c0_1, %c0_2] : memref<1x4x4x256xbf16, #tpu.memory_space<vmem>>, vector<1x1x4x128xbf16>
    %1 = vector.shape_cast %0 : vector<1x1x4x128xbf16> to vector<4x128xbf16>
    %c0_3 = arith.constant 0 : index
    %c0_4 = arith.constant 0 : index
    %2 = vector.load %arg6[%c0_3, %c0_4] : memref<36x128xbf16, #tpu.memory_space<vmem>>, vector<4x128xbf16>
    tpu.vector_store %arg6[%c0_3, %c0_4], %1 {strides = array<i32>} : memref<36x128xbf16, #tpu.memory_space<vmem>>, vector<4x128xbf16>,
    %3 = arith.extf %1 : vector<4x128xbf16> to vector<4x128xf32>
    %c0_5 = arith.constant 0 : index
    %c0_6 = arith.constant 0 : index
    %c0_7 = arith.constant 0 : index
    %4 = vector.load %arg2[%c0_5, %c0_6, %c0_7] : memref<4x1x256xf32, #tpu.memory_space<vmem>>, vector<1x1x128xf32>
    %5 = vector.shape_cast %4 : vector<1x1x128xf32> to vector<1x128xf32>
    %6 = vector.broadcast %5 : vector<1x128xf32> to vector<4x128xf32>
    %7 = arith.addf %3, %6 : vector<4x128xf32>
    %c0_8 = arith.constant 0 : index
    %c0_9 = arith.constant 0 : index
    %c0_10 = arith.constant 0 : index
    %c1 = arith.constant 1 : index
    %8 = vector.load %arg1[%c0_8, %c0_9, %c0_10, %c1] : memref<1x4x4x256xbf16, #tpu.memory_space<vmem>>, vector<1x1x4x128xbf16>
    %9 = vector.shape_cast %8 : vector<1x1x4x128xbf16> to vector<4x128xbf16>
    %c8 = arith.constant 8 : index
    %c0_11 = arith.constant 0 : index
    %10 = vector.load %arg6[%c8, %c0_11] : memref<36x128xbf16, #tpu.memory_space<vmem>>, vector<4x128xbf16>
    tpu.vector_store %arg6[%c8, %c0_11], %9 {strides = array<i32>} : memref<36x128xbf16, #tpu.memory_space<vmem>>, vector<4x128xbf16>,
    %11 = arith.extf %9 : vector<4x128xbf16> to vector<4x128xf32>
    %12 = arith.addf %3, %11 : vector<4x128xf32>
    %c0_12 = arith.constant 0 : index
    %c0_13 = arith.constant 0 : index
    %c1_14 = arith.constant 1 : index
    %13 = vector.load %arg2[%c0_12, %c0_13, %c1_14] : memref<4x1x256xf32, #tpu.memory_space<vmem>>, vector<1x1x128xf32>
    %14 = vector.shape_cast %13 : vector<1x1x128xf32> to vector<1x128xf32>
    %15 = vector.broadcast %14 : vector<1x128xf32> to vector<4x128xf32>
    %16 = arith.addf %11, %15 : vector<4x128xf32>
    %17 = arith.maximumf %7, %16 : vector<4x128xf32>
    %c0_15 = arith.constant 0 : index
    %c0_16 = arith.constant 0 : index
    %c0_17 = arith.constant 0 : index
    %c9 = arith.constant 9 : index
    %18 = vector.load %arg1[%c0_15, %c0_16, %c0_17, %c9] : memref<1x4x4x256xbf16, #tpu.memory_space<vmem>>, vector<1x1x4x128xbf16>
    %19 = vector.shape_cast %18 : vector<1x1x4x128xbf16> to vector<4x128xbf16>
    %c24 = arith.constant 24 : index
    %c0_18 = arith.constant 0 : index
    %20 = vector.load %arg6[%c24, %c0_18] : memref<36x128xbf16, #tpu.memory_space<vmem>>, vector<4x128xbf16>
    tpu.vector_store %arg6[%c24, %c0_18], %19 {strides = array<i32>} : memref<36x128xbf16, #tpu.memory_space<vmem>>, vector<4x128xbf16>,
    %21 = arith.extf %19 : vector<4x128xbf16> to vector<4x128xf32>
    %22 = arith.addf %12, %21 : vector<4x128xf32>
    %c0_19 = arith.constant 0 : index
    %c0_20 = arith.constant 0 : index
    %c9_21 = arith.constant 9 : index
    %23 = vector.load %arg2[%c0_19, %c0_20, %c9_21] : memref<4x1x256xf32, #tpu.memory_space<vmem>>, vector<1x1x128xf32>
    %24 = vector.shape_cast %23 : vector<1x1x128xf32> to vector<1x128xf32>
    %25 = vector.broadcast %24 : vector<1x128xf32> to vector<4x128xf32>
    %26 = arith.addf %21, %25 : vector<4x128xf32>
    %27 = arith.maximumf %17, %26 : vector<4x128xf32>
    %c0_22 = arith.constant 0 : index
    %c0_23 = arith.constant 0 : index
    %c0_24 = arith.constant 0 : index
    %c10 = arith.constant 10 : index
    %28 = vector.load %arg1[%c0_22, %c0_23, %c0_24, %c10] : memref<1x4x4x256xbf16, #tpu.memory_space<vmem>>, vector<1x1x4x128xbf16>
    %29 = vector.shape_cast %28 : vector<1x1x4x128xbf16> to vector<4x128xbf16>
    %c32 = arith.constant 32 : index
    %c0_25 = arith.constant 0 : index
    %30 = vector.load %arg6[%c32, %c0_25] : memref<36x128xbf16, #tpu.memory_space<vmem>>, vector<4x128xbf16>
    tpu.vector_store %arg6[%c32, %c0_25], %29 {strides = array<i32>} : memref<36x128xbf16, #tpu.memory_space<vmem>>, vector<4x128xbf16>,
    %31 = arith.extf %29 : vector<4x128xbf16> to vector<4x128xf32>
    %32 = arith.addf %22, %31 : vector<4x128xf32>
    %c0_26 = arith.constant 0 : index
    %c0_27 = arith.constant 0 : index
    %c10_28 = arith.constant 10 : index
    %33 = vector.load %arg2[%c0_26, %c0_27, %c10_28] : memref<4x1x256xf32, #tpu.memory_space<vmem>>, vector<1x1x128xf32>
    %34 = vector.shape_cast %33 : vector<1x1x128xf32> to vector<1x128xf32>
    %35 = vector.broadcast %34 : vector<1x128xf32> to vector<4x128xf32>
    %36 = arith.addf %31, %35 : vector<4x128xf32>
    %37 = arith.maximumf %27, %36 : vector<4x128xf32>
    %c0_29 = arith.constant 0 : index
    %c1_30 = arith.constant 1 : index
    %c0_31 = arith.constant 0 : index
    %c0_32 = arith.constant 0 : index
    %38 = vector.load %arg1[%c0_29, %c1_30, %c0_31, %c0_32] : memref<1x4x4x256xbf16, #tpu.memory_space<vmem>>, vector<1x1x4x128xbf16>
    %39 = vector.shape_cast %38 : vector<1x1x4x128xbf16> to vector<4x128xbf16>
    %c4 = arith.constant 4 : index
    %c0_33 = arith.constant 0 : index
    %40 = vector.load %arg6[%c4, %c0_33] : memref<36x128xbf16, #tpu.memory_space<vmem>>, vector<4x128xbf16>
    tpu.vector_store %arg6[%c4, %c0_33], %39 {strides = array<i32>} : memref<36x128xbf16, #tpu.memory_space<vmem>>, vector<4x128xbf16>,
    %41 = arith.extf %39 : vector<4x128xbf16> to vector<4x128xf32>
    %42 = arith.addf %32, %41 : vector<4x128xf32>
    %c1_34 = arith.constant 1 : index
    %c0_35 = arith.constant 0 : index
    %c0_36 = arith.constant 0 : index
    %43 = vector.load %arg2[%c1_34, %c0_35, %c0_36] : memref<4x1x256xf32, #tpu.memory_space<vmem>>, vector<1x1x128xf32>
    %44 = vector.shape_cast %43 : vector<1x1x128xf32> to vector<1x128xf32>
    %45 = vector.broadcast %44 : vector<1x128xf32> to vector<4x128xf32>
    %46 = arith.addf %41, %45 : vector<4x128xf32>
    %47 = arith.maximumf %37, %46 : vector<4x128xf32>
    %c0_37 = arith.constant 0 : index
    %c1_38 = arith.constant 1 : index
    %c0_39 = arith.constant 0 : index
    %c1_40 = arith.constant 1 : index
    %48 = vector.load %arg1[%c0_37, %c1_38, %c0_39, %c1_40] : memref<1x4x4x256xbf16, #tpu.memory_space<vmem>>, vector<1x1x4x128xbf16>
    %49 = vector.shape_cast %48 : vector<1x1x4x128xbf16> to vector<4x128xbf16>
    %50 = arith.extf %49 : vector<4x128xbf16> to vector<4x128xf32>
    %51 = arith.addf %42, %50 : vector<4x128xf32>
    %c1_41 = arith.constant 1 : index
    %c0_42 = arith.constant 0 : index
    %c1_43 = arith.constant 1 : index
    %52 = vector.load %arg2[%c1_41, %c0_42, %c1_43] : memref<4x1x256xf32, #tpu.memory_space<vmem>>, vector<1x1x128xf32>
    %53 = vector.shape_cast %52 : vector<1x1x128xf32> to vector<1x128xf32>
    %54 = vector.broadcast %53 : vector<1x128xf32> to vector<4x128xf32>
    %55 = arith.addf %50, %54 : vector<4x128xf32>
    %56 = arith.maximumf %47, %55 : vector<4x128xf32>
    %c0_44 = arith.constant 0 : index
    %c1_45 = arith.constant 1 : index
    %c0_46 = arith.constant 0 : index
    %c9_47 = arith.constant 9 : index
    %57 = vector.load %arg1[%c0_44, %c1_45, %c0_46, %c9_47] : memref<1x4x4x256xbf16, #tpu.memory_space<vmem>>, vector<1x1x4x128xbf16>
    %58 = vector.shape_cast %57 : vector<1x1x4x128xbf16> to vector<4x128xbf16>
    %c28 = arith.constant 28 : index
    %c0_48 = arith.constant 0 : index
    %59 = vector.load %arg6[%c28, %c0_48] : memref<36x128xbf16, #tpu.memory_space<vmem>>, vector<4x128xbf16>
    tpu.vector_store %arg6[%c28, %c0_48], %58 {strides = array<i32>} : memref<36x128xbf16, #tpu.memory_space<vmem>>, vector<4x128xbf16>,
    %60 = arith.extf %58 : vector<4x128xbf16> to vector<4x128xf32>
    %61 = arith.addf %51, %60 : vector<4x128xf32>
    %c1_49 = arith.constant 1 : index
    %c0_50 = arith.constant 0 : index
    %c9_51 = arith.constant 9 : index
    %62 = vector.load %arg2[%c1_49, %c0_50, %c9_51] : memref<4x1x256xf32, #tpu.memory_space<vmem>>, vector<1x1x128xf32>
    %63 = vector.shape_cast %62 : vector<1x1x128xf32> to vector<1x128xf32>
    %64 = vector.broadcast %63 : vector<1x128xf32> to vector<4x128xf32>
    %65 = arith.addf %60, %64 : vector<4x128xf32>
    %66 = arith.maximumf %56, %65 : vector<4x128xf32>
    %c0_52 = arith.constant 0 : index
    %c1_53 = arith.constant 1 : index
    %c0_54 = arith.constant 0 : index
    %c10_55 = arith.constant 10 : index
    %67 = vector.load %arg1[%c0_52, %c1_53, %c0_54, %c10_55] : memref<1x4x4x256xbf16, #tpu.memory_space<vmem>>, vector<1x1x4x128xbf16>
    %68 = vector.shape_cast %67 : vector<1x1x4x128xbf16> to vector<4x128xbf16>
    %69 = arith.extf %68 : vector<4x128xbf16> to vector<4x128xf32>
    %70 = arith.addf %61, %69 : vector<4x128xf32>
    %c1_56 = arith.constant 1 : index
    %c0_57 = arith.constant 0 : index
    %c10_58 = arith.constant 10 : index
    %71 = vector.load %arg2[%c1_56, %c0_57, %c10_58] : memref<4x1x256xf32, #tpu.memory_space<vmem>>, vector<1x1x128xf32>
    %72 = vector.shape_cast %71 : vector<1x1x128xf32> to vector<1x128xf32>
    %73 = vector.broadcast %72 : vector<1x128xf32> to vector<4x128xf32>
    %74 = arith.addf %69, %73 : vector<4x128xf32>
    %75 = arith.maximumf %66, %74 : vector<4x128xf32>
    %c0_59 = arith.constant 0 : index
    %c2 = arith.constant 2 : index
    %c0_60 = arith.constant 0 : index
    %c0_61 = arith.constant 0 : index
    %76 = vector.load %arg1[%c0_59, %c2, %c0_60, %c0_61] : memref<1x4x4x256xbf16, #tpu.memory_space<vmem>>, vector<1x1x4x128xbf16>
    %77 = vector.shape_cast %76 : vector<1x1x4x128xbf16> to vector<4x128xbf16>
    %c12 = arith.constant 12 : index
    %c0_62 = arith.constant 0 : index
    %78 = vector.load %arg6[%c12, %c0_62] : memref<36x128xbf16, #tpu.memory_space<vmem>>, vector<4x128xbf16>
    tpu.vector_store %arg6[%c12, %c0_62], %77 {strides = array<i32>} : memref<36x128xbf16, #tpu.memory_space<vmem>>, vector<4x128xbf16>,
    %79 = arith.extf %77 : vector<4x128xbf16> to vector<4x128xf32>
    %80 = arith.addf %70, %79 : vector<4x128xf32>
    %c2_63 = arith.constant 2 : index
    %c0_64 = arith.constant 0 : index
    %c0_65 = arith.constant 0 : index
    %81 = vector.load %arg2[%c2_63, %c0_64, %c0_65] : memref<4x1x256xf32, #tpu.memory_space<vmem>>, vector<1x1x128xf32>
    %82 = vector.shape_cast %81 : vector<1x1x128xf32> to vector<1x128xf32>
    %83 = vector.broadcast %82 : vector<1x128xf32> to vector<4x128xf32>
    %84 = arith.addf %79, %83 : vector<4x128xf32>
    %85 = arith.maximumf %75, %84 : vector<4x128xf32>
    %c0_66 = arith.constant 0 : index
    %c2_67 = arith.constant 2 : index
    %c0_68 = arith.constant 0 : index
    %c1_69 = arith.constant 1 : index
    %86 = vector.load %arg1[%c0_66, %c2_67, %c0_68, %c1_69] : memref<1x4x4x256xbf16, #tpu.memory_space<vmem>>, vector<1x1x4x128xbf16>
    %87 = vector.shape_cast %86 : vector<1x1x4x128xbf16> to vector<4x128xbf16>
    %c20 = arith.constant 20 : index
    %c0_70 = arith.constant 0 : index
    %88 = vector.load %arg6[%c20, %c0_70] : memref<36x128xbf16, #tpu.memory_space<vmem>>, vector<4x128xbf16>
    tpu.vector_store %arg6[%c20, %c0_70], %87 {strides = array<i32>} : memref<36x128xbf16, #tpu.memory_space<vmem>>, vector<4x128xbf16>,
    %89 = arith.extf %87 : vector<4x128xbf16> to vector<4x128xf32>
    %90 = arith.addf %80, %89 : vector<4x128xf32>
    %c2_71 = arith.constant 2 : index
    %c0_72 = arith.constant 0 : index
    %c1_73 = arith.constant 1 : index
    %91 = vector.load %arg2[%c2_71, %c0_72, %c1_73] : memref<4x1x256xf32, #tpu.memory_space<vmem>>, vector<1x1x128xf32>
    %92 = vector.shape_cast %91 : vector<1x1x128xf32> to vector<1x128xf32>
    %93 = vector.broadcast %92 : vector<1x128xf32> to vector<4x128xf32>
    %94 = arith.addf %89, %93 : vector<4x128xf32>
    %95 = arith.maximumf %85, %94 : vector<4x128xf32>
    %c0_74 = arith.constant 0 : index
    %c2_75 = arith.constant 2 : index
    %c0_76 = arith.constant 0 : index
    %c9_77 = arith.constant 9 : index
    %96 = vector.load %arg1[%c0_74, %c2_75, %c0_76, %c9_77] : memref<1x4x4x256xbf16, #tpu.memory_space<vmem>>, vector<1x1x4x128xbf16>
    %97 = vector.shape_cast %96 : vector<1x1x4x128xbf16> to vector<4x128xbf16>
    %98 = arith.extf %97 : vector<4x128xbf16> to vector<4x128xf32>
    %99 = arith.addf %90, %98 : vector<4x128xf32>
    %c2_78 = arith.constant 2 : index
    %c0_79 = arith.constant 0 : index
    %c9_80 = arith.constant 9 : index
    %100 = vector.load %arg2[%c2_78, %c0_79, %c9_80] : memref<4x1x256xf32, #tpu.memory_space<vmem>>, vector<1x1x128xf32>
    %101 = vector.shape_cast %100 : vector<1x1x128xf32> to vector<1x128xf32>
    %102 = vector.broadcast %101 : vector<1x128xf32> to vector<4x128xf32>
    %103 = arith.addf %98, %102 : vector<4x128xf32>
    %104 = arith.maximumf %95, %103 : vector<4x128xf32>
    %c0_81 = arith.constant 0 : index
    %c2_82 = arith.constant 2 : index
    %c0_83 = arith.constant 0 : index
    %c10_84 = arith.constant 10 : index
    %105 = vector.load %arg1[%c0_81, %c2_82, %c0_83, %c10_84] : memref<1x4x4x256xbf16, #tpu.memory_space<vmem>>, vector<1x1x4x128xbf16>
    %106 = vector.shape_cast %105 : vector<1x1x4x128xbf16> to vector<4x128xbf16>
    %107 = arith.extf %106 : vector<4x128xbf16> to vector<4x128xf32>
    %108 = arith.addf %99, %107 : vector<4x128xf32>
    %c2_85 = arith.constant 2 : index
    %c0_86 = arith.constant 0 : index
    %c10_87 = arith.constant 10 : index
    %109 = vector.load %arg2[%c2_85, %c0_86, %c10_87] : memref<4x1x256xf32, #tpu.memory_space<vmem>>, vector<1x1x128xf32>
    %110 = vector.shape_cast %109 : vector<1x1x128xf32> to vector<1x128xf32>
    %111 = vector.broadcast %110 : vector<1x128xf32> to vector<4x128xf32>
    %112 = arith.addf %107, %111 : vector<4x128xf32>
    %113 = arith.maximumf %104, %112 : vector<4x128xf32>
    %c0_88 = arith.constant 0 : index
    %c3 = arith.constant 3 : index
    %c0_89 = arith.constant 0 : index
    %c0_90 = arith.constant 0 : index
    %114 = vector.load %arg1[%c0_88, %c3, %c0_89, %c0_90] : memref<1x4x4x256xbf16, #tpu.memory_space<vmem>>, vector<1x1x4x128xbf16>
    %115 = vector.shape_cast %114 : vector<1x1x4x128xbf16> to vector<4x128xbf16>
    %c16 = arith.constant 16 : index
    %c0_91 = arith.constant 0 : index
    %116 = vector.load %arg6[%c16, %c0_91] : memref<36x128xbf16, #tpu.memory_space<vmem>>, vector<4x128xbf16>
    tpu.vector_store %arg6[%c16, %c0_91], %115 {strides = array<i32>} : memref<36x128xbf16, #tpu.memory_space<vmem>>, vector<4x128xbf16>,
    %117 = arith.extf %115 : vector<4x128xbf16> to vector<4x128xf32>
    %118 = arith.addf %108, %117 : vector<4x128xf32>
    %c3_92 = arith.constant 3 : index
    %c0_93 = arith.constant 0 : index
    %c0_94 = arith.constant 0 : index
    %119 = vector.load %arg2[%c3_92, %c0_93, %c0_94] : memref<4x1x256xf32, #tpu.memory_space<vmem>>, vector<1x1x128xf32>
    %120 = vector.shape_cast %119 : vector<1x1x128xf32> to vector<1x128xf32>
    %121 = vector.broadcast %120 : vector<1x128xf32> to vector<4x128xf32>
    %122 = arith.addf %117, %121 : vector<4x128xf32>
    %123 = arith.maximumf %113, %122 : vector<4x128xf32>
    %c0_95 = arith.constant 0 : index
    %c3_96 = arith.constant 3 : index
    %c0_97 = arith.constant 0 : index
    %c1_98 = arith.constant 1 : index
    %124 = vector.load %arg1[%c0_95, %c3_96, %c0_97, %c1_98] : memref<1x4x4x256xbf16, #tpu.memory_space<vmem>>, vector<1x1x4x128xbf16>
    %125 = vector.shape_cast %124 : vector<1x1x4x128xbf16> to vector<4x128xbf16>
    %126 = arith.extf %125 : vector<4x128xbf16> to vector<4x128xf32>
    %127 = arith.addf %118, %126 : vector<4x128xf32>
    %c3_99 = arith.constant 3 : index
    %c0_100 = arith.constant 0 : index
    %c1_101 = arith.constant 1 : index
    %128 = vector.load %arg2[%c3_99, %c0_100, %c1_101] : memref<4x1x256xf32, #tpu.memory_space<vmem>>, vector<1x1x128xf32>
    %129 = vector.shape_cast %128 : vector<1x1x128xf32> to vector<1x128xf32>
    %130 = vector.broadcast %129 : vector<1x128xf32> to vector<4x128xf32>
    %131 = arith.addf %126, %130 : vector<4x128xf32>
    %132 = arith.maximumf %123, %131 : vector<4x128xf32>
    %c0_102 = arith.constant 0 : index
    %c3_103 = arith.constant 3 : index
    %c0_104 = arith.constant 0 : index
    %c9_105 = arith.constant 9 : index
    %133 = vector.load %arg1[%c0_102, %c3_103, %c0_104, %c9_105] : memref<1x4x4x256xbf16, #tpu.memory_space<vmem>>, vector<1x1x4x128xbf16>
    %134 = vector.shape_cast %133 : vector<1x1x4x128xbf16> to vector<4x128xbf16>
    %135 = arith.extf %134 : vector<4x128xbf16> to vector<4x128xf32>
    %136 = arith.addf %127, %135 : vector<4x128xf32>
    %c3_106 = arith.constant 3 : index
    %c0_107 = arith.constant 0 : index
    %c9_108 = arith.constant 9 : index
    %137 = vector.load %arg2[%c3_106, %c0_107, %c9_108] : memref<4x1x256xf32, #tpu.memory_space<vmem>>, vector<1x1x128xf32>
    %138 = vector.shape_cast %137 : vector<1x1x128xf32> to vector<1x128xf32>
    %139 = vector.broadcast %138 : vector<1x128xf32> to vector<4x128xf32>
    %140 = arith.addf %135, %139 : vector<4x128xf32>
    %141 = arith.maximumf %132, %140 : vector<4x128xf32>
    %c0_109 = arith.constant 0 : index
    %c3_110 = arith.constant 3 : index
    %c0_111 = arith.constant 0 : index
    %c10_112 = arith.constant 10 : index
    %142 = vector.load %arg1[%c0_109, %c3_110, %c0_111, %c10_112] : memref<1x4x4x256xbf16, #tpu.memory_space<vmem>>, vector<1x1x4x128xbf16>
    %143 = vector.shape_cast %142 : vector<1x1x4x128xbf16> to vector<4x128xbf16>
    %144 = arith.extf %143 : vector<4x128xbf16> to vector<4x128xf32>
    %145 = arith.addf %136, %144 : vector<4x128xf32>
    %c3_113 = arith.constant 3 : index
    %c0_114 = arith.constant 0 : index
    %c10_115 = arith.constant 10 : index
    %146 = vector.load %arg2[%c3_113, %c0_114, %c10_115] : memref<4x1x256xf32, #tpu.memory_space<vmem>>, vector<1x1x128xf32>
    %147 = vector.shape_cast %146 : vector<1x1x128xf32> to vector<1x128xf32>
    %148 = vector.broadcast %147 : vector<1x128xf32> to vector<4x128xf32>
    %149 = arith.addf %144, %148 : vector<4x128xf32>
    %150 = arith.maximumf %141, %149 : vector<4x128xf32>
    %cst = arith.constant 6.250000e-02 : f32
    %151 = vector.broadcast %cst : f32 to vector<4x128xf32>
    %152 = arith.mulf %145, %151 : vector<4x128xf32>
    %c0_116 = arith.constant 0 : index
    %c0_117 = arith.constant 0 : index
    %153 = vector.load %arg3[%c0_116, %c0_117] : memref<8x36xbf16, #tpu.memory_space<vmem>>, vector<8x36xbf16>
    %c0_118 = arith.constant 0 : index
    %c0_119 = arith.constant 0 : index
    %154 = vector.load %arg6[%c0_118, %c0_119] : memref<36x128xbf16, #tpu.memory_space<vmem>>, vector<36x128xbf16>
    %cst_120 = arith.constant dense<0.000000e+00> : vector<8x128xf32>
    %155 = tpu.matmul %153, %154, %cst_120 {dimension_numbers = #tpu.dot_dimension_numbers<[1], [0], [0], [1], [0, 0, 1, 1], [], []>} : vector<8x36xbf16>, vector<36x128xbf16>, vector<8x128xf32> -> vector<8x128xf32>
    %c0_121 = arith.constant 0 : index
    %c0_122 = arith.constant 0 : index
    %156 = vector.load %arg4[%c0_121, %c0_122] : memref<8x1xf32, #tpu.memory_space<vmem>>, vector<8x1xf32>
    %157 = vector.broadcast %156 : vector<8x1xf32> to vector<8x128xf32>
    %158 = arith.addf %155, %157 : vector<8x128xf32>
    %cst_123 = arith.constant 0.000000e+00 : f32
    %159 = vector.broadcast %cst_123 : f32 to vector<8x128xf32>
    %160 = arith.subf %159, %158 : vector<8x128xf32>
    %161 = math.exp %160 : vector<8x128xf32>
    %cst_124 = arith.constant 1.000000e+00 : f32
    %162 = vector.broadcast %cst_124 : f32 to vector<8x128xf32>
    %163 = arith.addf %162, %161 : vector<8x128xf32>
    %164 = tpu.reciprocal %163 {approx = true} : vector<8x128xf32> -> vector<8x128xf32>
    %165 = arith.mulf %158, %164 : vector<8x128xf32>
    %166 = tpu.concatenate %152, %150 in 0 : vector<4x128xf32>, vector<4x128xf32> -> vector<8x128xf32>
    %167 = arith.addf %165, %166 : vector<8x128xf32>
    %c0_125 = arith.constant 0 : index
    %c0_126 = arith.constant 0 : index
    %c0_127 = arith.constant 0 : index
    %168 = vector.load %arg5[%c0_125, %c0_126, %c0_127] : memref<1x8x128xf32, #tpu.memory_space<vmem>>, vector<1x8x128xf32>
    %169 = vector.shape_cast %168 : vector<1x8x128xf32> to vector<8x128xf32>
    %170 = vector.shape_cast %167 : vector<8x128xf32> to vector<1x8x128xf32>
    tpu.vector_store %arg5[%c0_125, %c0_126, %c0_127], %170 {strides = array<i32>} : memref<1x8x128xf32, #tpu.memory_space<vmem>>, vector<1x8x128xf32>,
    return
  }
  func.func @transform_0(%arg0: i32) -> (i32, i32, i32, i32) {
    %c0_i32 = arith.constant 0 : i32
    %c0_i32_0 = arith.constant 0 : i32
    %c0_i32_1 = arith.constant 0 : i32
    %c0_i32_2 = arith.constant 0 : i32
    return %arg0, %c0_i32, %c0_i32_0, %c0_i32_1 : i32, i32, i32, i32
  }
  func.func @transform_1(%arg0: i32) -> (i32, i32, i32) {
    %c0_i32 = arith.constant 0 : i32
    %c0_i32_0 = arith.constant 0 : i32
    %c0_i32_1 = arith.constant 0 : i32
    %c0_i32_2 = arith.constant 0 : i32
    return %c0_i32, %c0_i32_0, %c0_i32_1 : i32, i32, i32
  }
  func.func @transform_2(%arg0: i32) -> (i32, i32) {
    %c0_i32 = arith.constant 0 : i32
    %c0_i32_0 = arith.constant 0 : i32
    %c0_i32_1 = arith.constant 0 : i32
    return %c0_i32, %c0_i32_0 : i32, i32
  }
  func.func @transform_3(%arg0: i32) -> (i32, i32) {
    %c0_i32 = arith.constant 0 : i32
    %c0_i32_0 = arith.constant 0 : i32
    %c0_i32_1 = arith.constant 0 : i32
    return %c0_i32, %c0_i32_0 : i32, i32
  }
  func.func @transform_4(%arg0: i32) -> (i32, i32, i32) {
    %c0_i32 = arith.constant 0 : i32
    %c0_i32_0 = arith.constant 0 : i32
    %c0_i32_1 = arith.constant 0 : i32
    return %arg0, %c0_i32, %c0_i32_0 : i32, i32, i32
  }
}

</mosaic_0001>

<llo_original>
// kernel: tpu_custom_call.1
$region0: #{tpu_custom_call.1}
  #allocation0 [shape = 'u32[]', space=smem, size = 0x4, offset = 0x4, fixed_abs, tag = 'smem constant byte address 0x4 - core index']
  #allocation1 [shape = 'u32[144,128]{1,0:T(1,128)}', space=vmem, size = 0x12000, scoped, tag = 'internal scratch']
  #allocation2 [shape = 'bf16[36,128]{1,0:T(8,128)(2,1)}', space=vmem, size = 0x2800, scoped, tag = 'scratch operand']
  %s0 = inlined_call_operand.hbm [shape: bf16[2,4,4,256], index: 0, kind: input, shape index: {}]
  %s1 = inlined_call_operand.vmem [shape: f32[4,1,256], index: 1, kind: input, shape index: {}]
  %s2 = inlined_call_operand.vmem [shape: bf16[8,36], index: 2, kind: input, shape index: {}]
  %s3 = inlined_call_operand.vmem [shape: f32[8,1], index: 3, kind: input, shape index: {}]
  %s4 = inlined_call_operand.hbm [shape: f32[2,8,128], index: 4, kind: output, shape index: {}]
  %s5 = sld [smem:[#allocation0]]
  $region53: #{tpu_custom_call.1} parent=0
    _
  %s7 = ssub.s32 1, %s5
  %s8 = scalar_select 0, %s7, %s5
  $region1: #{tpu_custom_call.1} parent=0
    #allocation3 [shape = 'u8[16384]{0}', space=vmem, size = 0x4000, scoped, tag = 'input window, operand 0']
    #allocation4 [shape = 's32[2]{0}', space=sflag, size = 0x8, scoped, tag = 'scoped memory for tpu_custom_call.1']
    #allocation5 [shape = 's32[2]{0}', space=sflag, size = 0x8, scoped, tag = 'scoped memory for tpu_custom_call.1']
    #allocation6 [shape = 'u8[8192]{0}', space=vmem, size = 0x2000, scoped, tag = 'output window, operand 0']
    %9 = vsyncpa [#allocation4], 0
    %s10 = scalar_lea.sflag [#allocation4], 1
    %11 = vsyncpa %s10, 0
    %12 = vsyncpa [#allocation5], 0
    %s13 = scalar_lea.sflag [#allocation5], 1
    %14 = vsyncpa %s13, 0
    loop: start=0, step=1, limit=4
    $region2: #{tpu_custom_call.1} parent=1 // loop_pre_header
      _
    $region3: #{tpu_custom_call.1} parent=1 // loop_header
      %s16 = sphi 0, %s20
      %p17 = scmp.ge.s32.totalorder %s16, 4
      %s26 = sphi 0, %s28
      %s29 = sphi 0, %s26
      %s30 = sphi 0, %s29
      %s46 = sphi 0, %s30
      %s50 = sphi 0, %s50
      %s52 = sphi 0, %s50
      %s53 = sphi 0, %s52
      %s67 = sphi 0, %s53
      %s71 = sphi 0, %s71
      %s73 = sphi 0, %s71
      %s74 = sphi 0, %s73
      %s88 = sphi 0, %s74
      %s92 = sphi 0, %s92
      %s94 = sphi 0, %s92
      %s95 = sphi 0, %s94
      %s109 = sphi 0, %s95
      %s115 = sphi 0, %s117
      %s118 = sphi 0, %s115
      %s119 = sphi 0, %s118
      %s135 = sphi 0, %s119
    $region4: #{tpu_custom_call.1} parent=1 // loop_header_branch
      %19 = sbr.rel (%p17) target = $region8
    $region5: #{tpu_custom_call.1} parent=1 // loop_body
      %s21 = ssub.s32 %s16, 1
      %s22 = ssub.s32 %s16, 2
      %s23 = sadd.s32 %s16, 1
      %s24 = ssub.s32 %s16, %s23
      %p25 = scmp.eq.s32.totalorder %s24, 0
      %s27 = sadd.s32 %s26, 1
      %s28 = scalar_select %p25, %s26, %s27
      %p31 = pneg %p25
      %p32 = scmp.eq.s32.totalorder %s16, 1
      %p33 = por %p31, %p32
      %p34 = scmp.ne.s32.totalorder %s26, %s29
      %p35 = scmp.eq.s32.totalorder %s16, 0
      %p36 = por %p34, %p35
      %p37 = scmp.ne.s32.totalorder %s26, %s29
      %p38 = scmp.eq.s32.totalorder %s21, 1
      %p39 = por %p37, %p38
      %p40 = scmp.ne.s32.totalorder %s29, %s30
      %p41 = scmp.eq.s32.totalorder %s21, 0
      %p42 = por %p40, %p41
      %p43 = scmp.ne.s32.totalorder %s29, %s30
      %p44 = scmp.eq.s32.totalorder %s22, 1
      %p45 = por %p43, %p44
      %p47 = scmp.ne.s32.totalorder %s30, %s46
      %p48 = scmp.eq.s32.totalorder %s22, 0
      %p49 = por %p47, %p48
      %s51 = sadd.s32 %s50, 1
      %p54 = scmp.eq.s32.totalorder %s16, 1
      %p55 = scmp.ne.s32.totalorder %s50, %s52
      %p56 = scmp.eq.s32.totalorder %s16, 0
      %p57 = por %p55, %p56
      %p58 = scmp.ne.s32.totalorder %s50, %s52
      %p59 = scmp.eq.s32.totalorder %s21, 1
      %p60 = por %p58, %p59
      %p61 = scmp.ne.s32.totalorder %s52, %s53
      %p62 = scmp.eq.s32.totalorder %s21, 0
      %p63 = por %p61, %p62
      %p64 = scmp.ne.s32.totalorder %s52, %s53
      %p65 = scmp.eq.s32.totalorder %s22, 1
      %p66 = por %p64, %p65
      %p68 = scmp.ne.s32.totalorder %s53, %s67
      %p69 = scmp.eq.s32.totalorder %s22, 0
      %p70 = por %p68, %p69
      %s72 = sadd.s32 %s71, 1
      %p75 = scmp.eq.s32.totalorder %s16, 1
      %p76 = scmp.ne.s32.totalorder %s71, %s73
      %p77 = scmp.eq.s32.totalorder %s16, 0
      %p78 = por %p76, %p77
      %p79 = scmp.ne.s32.totalorder %s71, %s73
      %p80 = scmp.eq.s32.totalorder %s21, 1
      %p81 = por %p79, %p80
      %p82 = scmp.ne.s32.totalorder %s73, %s74
      %p83 = scmp.eq.s32.totalorder %s21, 0
      %p84 = por %p82, %p83
      %p85 = scmp.ne.s32.totalorder %s73, %s74
      %p86 = scmp.eq.s32.totalorder %s22, 1
      %p87 = por %p85, %p86
      %p89 = scmp.ne.s32.totalorder %s74, %s88
      %p90 = scmp.eq.s32.totalorder %s22, 0
      %p91 = por %p89, %p90
      %s93 = sadd.s32 %s92, 1
      %p96 = scmp.eq.s32.totalorder %s16, 1
      %p97 = scmp.ne.s32.totalorder %s92, %s94
      %p98 = scmp.eq.s32.totalorder %s16, 0
      %p99 = por %p97, %p98
      %p100 = scmp.ne.s32.totalorder %s92, %s94
      %p101 = scmp.eq.s32.totalorder %s21, 1
      %p102 = por %p100, %p101
      %p103 = scmp.ne.s32.totalorder %s94, %s95
      %p104 = scmp.eq.s32.totalorder %s21, 0
      %p105 = por %p103, %p104
      %p106 = scmp.ne.s32.totalorder %s94, %s95
      %p107 = scmp.eq.s32.totalorder %s22, 1
      %p108 = por %p106, %p107
      %p110 = scmp.ne.s32.totalorder %s95, %s109
      %p111 = scmp.eq.s32.totalorder %s22, 0
      %p112 = por %p110, %p111
      %s113 = ssub.s32 %s16, %s23
      %p114 = scmp.eq.s32.totalorder %s113, 0
      %s116 = sadd.s32 %s115, 1
      %s117 = scalar_select %p114, %s115, %s116
      %p120 = pneg %p114
      %p121 = scmp.eq.s32.totalorder %s16, 1
      %p122 = por %p120, %p121
      %p123 = scmp.ne.s32.totalorder %s115, %s118
      %p124 = scmp.eq.s32.totalorder %s16, 0
      %p125 = por %p123, %p124
      %p126 = scmp.ne.s32.totalorder %s115, %s118
      %p127 = scmp.eq.s32.totalorder %s21, 1
      %p128 = por %p126, %p127
      %p129 = scmp.ne.s32.totalorder %s118, %s119
      %p130 = scmp.eq.s32.totalorder %s21, 0
      %p131 = por %p129, %p130
      %p132 = scmp.ne.s32.totalorder %s118, %s119
      %p133 = scmp.eq.s32.totalorder %s22, 1
      %p134 = por %p132, %p133
      %p136 = scmp.ne.s32.totalorder %s119, %s135
      %p137 = scmp.eq.s32.totalorder %s22, 0
      %p138 = por %p136, %p137
      %p139 = scmp.le.s32.totalorder 1, %s16
      %p140 = scmp.lt.s32.totalorder %s16, 3
      %p141 = pnand %p139, %p140
      %p142 = pneg %p141
      // Predicated region
      $region9: #{tpu_custom_call.1} parent=5 // pred_check
        _
      $region10: #{tpu_custom_call.1} parent=5 // pred_check_branch
        %144 = sbr.rel (%p141) target = $region12
      $region11: #{tpu_custom_call.1} parent=5 // pred_region
        %s145 = ssub.s32 %s16, 1
        // Predicated region
        $region13: #{tpu_custom_call.1} parent=11 // pred_check
          %p146 = pneg %p63
        $region14: #{tpu_custom_call.1} parent=11 // pred_check_branch
          %148 = sbr.rel (%p146) target = $region16
        $region15: #{tpu_custom_call.1} parent=11 // pred_region
          _
        $region16: #{tpu_custom_call.1} parent=11 // pred_fallthru
          _
        // Predicated region
        $region17: #{tpu_custom_call.1} parent=11 // pred_check
          %p149 = pneg %p84
        $region18: #{tpu_custom_call.1} parent=11 // pred_check_branch
          %151 = sbr.rel (%p149) target = $region20
        $region19: #{tpu_custom_call.1} parent=11 // pred_region
          _
        $region20: #{tpu_custom_call.1} parent=11 // pred_fallthru
          _
        // Predicated region
        $region21: #{tpu_custom_call.1} parent=11 // pred_check
          %p152 = pneg %p105
        $region22: #{tpu_custom_call.1} parent=11 // pred_check_branch
          %154 = sbr.rel (%p152) target = $region24
        $region23: #{tpu_custom_call.1} parent=11 // pred_region
          _
        $region24: #{tpu_custom_call.1} parent=11 // pred_fallthru
          _
      $region12: #{tpu_custom_call.1} parent=5 // pred_fallthru
        _
      %p155 = scmp.lt.s32.totalorder %s16, 2
      // Predicated region
      $region25: #{tpu_custom_call.1} parent=5 // pred_check
        %p156 = pneg %p155
      $region26: #{tpu_custom_call.1} parent=5 // pred_check_branch
        %158 = sbr.rel (%p156) target = $region28
      $region27: #{tpu_custom_call.1} parent=5 // pred_region
        // Predicated region
        $region29: #{tpu_custom_call.1} parent=27 // pred_check
          %p159 = pneg %p36
        $region30: #{tpu_custom_call.1} parent=27 // pred_check_branch
          %161 = sbr.rel (%p159) target = $region32
        $region31: #{tpu_custom_call.1} parent=27 // pred_region
          %s162 = sand.u32 %s26, 1
          %s163 = scalar_lea.sflag [#allocation4], %s162
          %s164 = sand.u32 %s26, 1
          %s165 = smul.addr %s164, 16
          %s166 = scalar_lea.vmem [#allocation3], %s165
          %s168 = ssub.s32 256, 256
          %169 = vsyncadd %s163, %s168
          %s170 = smul.addr %s16, 8
          %s171 = smul.addr %s170, 32
          %s172 = scalar_lea.hbm %s0, %s171
          %s173 = sshll.u32 %s166, 4
          %s174 = int_to_ptr.vmem [resolvable:$true] %s173
          %179 = dma.hbm_to_vmem [thread:$0]  %s172, 256, %s174, %s163, 64, 64, 4
        $region32: #{tpu_custom_call.1} parent=27 // pred_fallthru
          _
      $region28: #{tpu_custom_call.1} parent=5 // pred_fallthru
        _
      %p180 = scmp.le.s32.totalorder 1, %s16
      %p181 = scmp.lt.s32.totalorder %s16, 3
      %p182 = pnand %p180, %p181
      %p183 = pneg %p182
      // Predicated region
      $region33: #{tpu_custom_call.1} parent=5 // pred_check
        _
      $region34: #{tpu_custom_call.1} parent=5 // pred_check_branch
        %185 = sbr.rel (%p182) target = $region36
      $region35: #{tpu_custom_call.1} parent=5 // pred_region
        %s186 = ssub.s32 %s16, 1
        %s187 = sand.u32 %s29, 1
        %s188 = scalar_lea.sflag [#allocation4], %s187
        %s189 = sand.u32 %s29, 1
        %s190 = smul.addr %s189, 16
        %s191 = scalar_lea.vmem [#allocation3], %s190
        // Predicated region
        $region37: #{tpu_custom_call.1} parent=35 // pred_check
          %p192 = pneg %p42
        $region38: #{tpu_custom_call.1} parent=35 // pred_check_branch
          %194 = sbr.rel (%p192) target = $region40
        $region39: #{tpu_custom_call.1} parent=35 // pred_region
          %195 = dma.done %s188, 256
        $region40: #{tpu_custom_call.1} parent=35 // pred_fallthru
          _
        %s196 = sand.u32 %s29, 1
        %s197 = scalar_lea.sflag [#allocation4], %s196
        %s198 = sand.u32 %s29, 1
        %s199 = smul.addr %s198, 16
        %s200 = scalar_lea.vmem [#allocation3], %s199
        %p201 = pneg %p42
        %p202 = pneg %p39
        %p203 = pneg %p63
        %p204 = pneg %p60
        %p205 = pneg %p84
        %p206 = pneg %p81
        %p207 = pneg %p105
        %p208 = pneg %p102
        %p209 = pneg %p131
        %p210 = pneg %p128
        %s211 = sand.u32 %s118, 1
        %s212 = scalar_lea.sflag [#allocation5], %s211
        %s213 = sand.u32 %s118, 1
        %s214 = smul.addr %s213, 8
        %s215 = scalar_lea.vmem [#allocation6], %s214
        %v217 = vld [vmem:[%s191] sm:$0x3]
        %218 = vst [vmem:[#allocation2] sm:$0x3] %v217
        %v219 = vunpack.c.l.bf16 %v217
        %v220 = vld [vmem:[%s1] sm:$0x1]
        %v222 = vlaneseq
        %v223 = vshrl.u32 %v222, 7
        %v224 = vsub.s32 0, %v223
        %v225 = vrot.slane %v220, %v224
        %v227 = vadd.f32 %v219, %v225
        %v228 = vld [vmem:[%s191] sm:$0xf]
        %v231 = vunpack.c.l.s4 1983009808
        %v232 = vunpack.c.0.s8 %v231
        %v233 = vlaneseq
        %v234 = vshrl.u32 %v233, 7
        %v235 = vsub.s32 %v232, %v234
        %v236 = vrot.slane %v228, %v235
        %237 = vrot.lane.b32.xlu0 %v236, 127
        %v238 = vpop.permute.xlu0 %237
        %v239 = vrot.slane %v238, 4
        %vm240 = vcmask 1039360
        %v241 = vsel %vm240, %v238, %v239
        %243 = vst [vmem:[#allocation2 + $0x4] sm:$0x3] %v241
        %v244 = vunpack.c.l.bf16 %v228
        %246 = vrot.lane.b32.xlu0 %v244, 127
        %v247 = vpop.permute.xlu0 %246
        %v248 = vrot.slane %v247, 4
        %vm249 = vcmask 1039360
        %v250 = vsel %vm249, %v247, %v248
        %v252 = vadd.f32 %v219, %v250
        %v253 = vld [vmem:[%s1] sm:$0x3]
        %v255 = vlaneseq
        %v256 = vshrl.u32 %v255, 7
        %v257 = vsub.s32 0, %v256
        %v258 = vrot.slane %v253, %v257
        %v259 = vlaneseq
        %v260 = vshrl.u32 %v259, 7
        %v261 = vsub.s32 1, %v260
        %v262 = vrot.slane %v253, %v261
        %v263 = vcombine.low %v258, %v262
        %v265 = vadd.f32 %v244, %v263
        %267 = vrot.lane.b32.xlu0 %v265, 127
        %v268 = vpop.permute.xlu0 %267
        %v269 = vrot.slane %v268, 4
        %v270 = vsel %vm249, %v268, %v269
        %v272 = vmax.f32 %v227, %v270
        %v273 = vld [vmem:[%s191] sm:$0xf]
        %v276 = vunpack.c.l.s4 1983009808
        %v277 = vunpack.c.0.s8 %v276
        %v278 = vlaneseq
        %v279 = vshrl.u32 %v278, 7
        %v280 = vsub.s32 %v277, %v279
        %v281 = vrot.slane %v273, %v280
        %282 = vrot.lane.b32.xlu0 %v281, 119
        %v283 = vpop.permute.xlu0 %282
        %v284 = vrot.slane %v283, 4
        %vm285 = vcmask 973824
        %v286 = vsel %vm285, %v283, %v284
        %288 = vst [vmem:[#allocation2 + $0xc] sm:$0x3] %v286
        %v289 = vunpack.c.l.bf16 %v273
        %291 = vrot.lane.b32.xlu0 %v289, 119
        %v292 = vpop.permute.xlu0 %291
        %v293 = vrot.slane %v292, 4
        %vm294 = vcmask 973824
        %v295 = vsel %vm294, %v292, %v293
        %v297 = vadd.f32 %v252, %v295
        %v298 = vld [vmem:[%s1] sm:$0x3]
        %v300 = vlaneseq
        %v301 = vshrl.u32 %v300, 7
        %v302 = vsub.s32 0, %v301
        %v303 = vrot.slane %v298, %v302
        %v304 = vlaneseq
        %v305 = vshrl.u32 %v304, 7
        %v306 = vsub.s32 1, %v305
        %v307 = vrot.slane %v298, %v306
        %v308 = vcombine.low %v303, %v307
        %v310 = vadd.f32 %v289, %v308
        %312 = vrot.lane.b32.xlu0 %v310, 119
        %v313 = vpop.permute.xlu0 %312
        %v314 = vrot.slane %v313, 4
        %v315 = vsel %vm294, %v313, %v314
        %v317 = vmax.f32 %v272, %v315
        %v318 = vld [vmem:[%s191] sm:$0xf]
        %v321 = vunpack.c.l.s4 1983009808
        %v322 = vunpack.c.0.s8 %v321
        %v323 = vlaneseq
        %v324 = vshrl.u32 %v323, 7
        %v325 = vsub.s32 %v322, %v324
        %v326 = vrot.slane %v318, %v325
        %327 = vrot.lane.b32.xlu0 %v326, 118
        %v328 = vpop.permute.xlu0 %327
        %v329 = vrot.slane %v328, 4
        %vm330 = vcmask 965632
        %v331 = vsel %vm330, %v328, %v329
        %333 = vst [vmem:[#allocation2 + $0x10] sm:$0x3] %v331
        %v334 = vunpack.c.l.bf16 %v318
        %336 = vrot.lane.b32.xlu0 %v334, 118
        %v337 = vpop.permute.xlu0 %336
        %v338 = vrot.slane %v337, 4
        %vm339 = vcmask 965632
        %v340 = vsel %vm339, %v337, %v338
        %v342 = vadd.f32 %v297, %v340
        %v343 = vld [vmem:[%s1] sm:$0x3]
        %v345 = vlaneseq
        %v346 = vshrl.u32 %v345, 7
        %v347 = vsub.s32 0, %v346
        %v348 = vrot.slane %v343, %v347
        %v349 = vlaneseq
        %v350 = vshrl.u32 %v349, 7
        %v351 = vsub.s32 1, %v350
        %v352 = vrot.slane %v343, %v351
        %v353 = vcombine.low %v348, %v352
        %v355 = vadd.f32 %v334, %v353
        %357 = vrot.lane.b32.xlu0 %v355, 118
        %v358 = vpop.permute.xlu0 %357
        %v359 = vrot.slane %v358, 4
        %v360 = vsel %vm339, %v358, %v359
        %v362 = vmax.f32 %v317, %v360
        %s363 = scalar_lea.vmem %s191, 4 [#allocation3]
        %v364 = vld [vmem:[%s363] sm:$0x3]
        %v366 = vcombine.low %v364, %v364
        %v368 = vunpack.c.l.s4 1983009808
        %v369 = vunpack.c.0.s8 %v368
        %v370 = vlaneseq
        %v371 = vshrl.u32 %v370, 7
        %v372 = vsub.s32 %v369, %v371
        %v373 = vrot.slane %v366, %v372
        %375 = vst [vmem:[#allocation2] sm:$0xc] %v373
        %v376 = vunpack.c.l.bf16 %v364
        %v377 = vadd.f32 %v342, %v376
        %s378 = scalar_lea.vmem %s1, 2
        %v379 = vld [vmem:[%s378] sm:$0x1]
        %v381 = vlaneseq
        %v382 = vshrl.u32 %v381, 7
        %v383 = vsub.s32 0, %v382
        %v384 = vrot.slane %v379, %v383
        %v386 = vadd.f32 %v376, %v384
        %v387 = vmax.f32 %v362, %v386
        %v388 = vld [vmem:[%s363] sm:$0xf]
        %v389 = vunpack.c.l.bf16 %v388
        %391 = vrot.lane.b32.xlu0 %v389, 127
        %v392 = vpop.permute.xlu0 %391
        %v393 = vrot.slane %v392, 4
        %v394 = vsel %vm249, %v392, %v393
        %v396 = vadd.f32 %v377, %v394
        %v397 = vld [vmem:[%s378] sm:$0x3]
        %v399 = vlaneseq
        %v400 = vshrl.u32 %v399, 7
        %v401 = vsub.s32 0, %v400
        %v402 = vrot.slane %v397, %v401
        %v403 = vlaneseq
        %v404 = vshrl.u32 %v403, 7
        %v405 = vsub.s32 1, %v404
        %v406 = vrot.slane %v397, %v405
        %v407 = vcombine.low %v402, %v406
        %v409 = vadd.f32 %v389, %v407
        %411 = vrot.lane.b32.xlu0 %v409, 127
        %v412 = vpop.permute.xlu0 %411
        %v413 = vrot.slane %v412, 4
        %v414 = vsel %vm249, %v412, %v413
        %v416 = vmax.f32 %v387, %v414
        %v418 = vcombine.low %v388, %v388
        %v420 = vunpack.c.l.s4 1983009808
        %v421 = vunpack.c.0.s8 %v420
        %v422 = vlaneseq
        %v423 = vshrl.u32 %v422, 7
        %v424 = vsub.s32 %v421, %v423
        %v425 = vrot.slane %v418, %v424
        %426 = vrot.lane.b32.xlu0 %v425, 119
        %v427 = vpop.permute.xlu0 %426
        %v428 = vrot.slane %v427, 4
        %v429 = vsel %vm285, %v427, %v428
        %431 = vst [vmem:[#allocation2 + $0xc] sm:$0xc] %v429
        %432 = vrot.lane.b32.xlu0 %v389, 119
        %v433 = vpop.permute.xlu0 %432
        %v434 = vrot.slane %v433, 4
        %v435 = vsel %vm294, %v433, %v434
        %v437 = vadd.f32 %v396, %v435
        %v438 = vld [vmem:[%s378] sm:$0x3]
        %v440 = vlaneseq
        %v441 = vshrl.u32 %v440, 7
        %v442 = vsub.s32 0, %v441
        %v443 = vrot.slane %v438, %v442
        %v444 = vlaneseq
        %v445 = vshrl.u32 %v444, 7
        %v446 = vsub.s32 1, %v445
        %v447 = vrot.slane %v438, %v446
        %v448 = vcombine.low %v443, %v447
        %v450 = vadd.f32 %v389, %v448
        %452 = vrot.lane.b32.xlu0 %v450, 119
        %v453 = vpop.permute.xlu0 %452
        %v454 = vrot.slane %v453, 4
        %v455 = vsel %vm294, %v453, %v454
        %v457 = vmax.f32 %v416, %v455
        %v458 = vld [vmem:[%s363] sm:$0xf]
        %v459 = vunpack.c.l.bf16 %v458
        %461 = vrot.lane.b32.xlu0 %v459, 118
        %v462 = vpop.permute.xlu0 %461
        %v463 = vrot.slane %v462, 4
        %v464 = vsel %vm339, %v462, %v463
        %v466 = vadd.f32 %v437, %v464
        %v467 = vadd.f32 %v459, %v448
        %469 = vrot.lane.b32.xlu0 %v467, 118
        %v470 = vpop.permute.xlu0 %469
        %v471 = vrot.slane %v470, 4
        %v472 = vsel %vm339, %v470, %v471
        %v474 = vmax.f32 %v457, %v472
        %s475 = scalar_lea.vmem %s191, 8 [#allocation3]
        %v476 = vld [vmem:[%s475] sm:$0x3]
        %v478 = vcombine.low %v476, %v476
        %v480 = vunpack.c.l.s4 1983009808
        %v481 = vunpack.c.0.s8 %v480
        %v482 = vlaneseq
        %v483 = vshrl.u32 %v482, 7
        %v484 = vsub.s32 %v481, %v483
        %v485 = vrot.slane %v478, %v484
        %487 = vst [vmem:[#allocation2 + $0x4] sm:$0xc] %v485
        %v488 = vunpack.c.l.bf16 %v476
        %v489 = vadd.f32 %v466, %v488
        %s490 = scalar_lea.vmem %s1, 4
        %v491 = vld [vmem:[%s490] sm:$0x1]
        %v493 = vlaneseq
        %v494 = vshrl.u32 %v493, 7
        %v495 = vsub.s32 0, %v494
        %v496 = vrot.slane %v491, %v495
        %v498 = vadd.f32 %v488, %v496
        %v499 = vmax.f32 %v474, %v498
        %v500 = vld [vmem:[%s475] sm:$0xf]
        %v502 = vcombine.low %v500, %v500
        %v504 = vunpack.c.l.s4 1983009808
        %v505 = vunpack.c.0.s8 %v504
        %v506 = vlaneseq
        %v507 = vshrl.u32 %v506, 7
        %v508 = vsub.s32 %v505, %v507
        %v509 = vrot.slane %v502, %v508
        %510 = vrot.lane.b32.xlu0 %v509, 127
        %v511 = vpop.permute.xlu0 %510
        %v512 = vrot.slane %v511, 4
        %v513 = vsel %vm240, %v511, %v512
        %515 = vst [vmem:[#allocation2 + $0x8] sm:$0xc] %v513
        %v516 = vunpack.c.l.bf16 %v500
        %518 = vrot.lane.b32.xlu0 %v516, 127
        %v519 = vpop.permute.xlu0 %518
        %v520 = vrot.slane %v519, 4
        %v521 = vsel %vm249, %v519, %v520
        %v523 = vadd.f32 %v489, %v521
        %v524 = vld [vmem:[%s490] sm:$0x3]
        %v526 = vlaneseq
        %v527 = vshrl.u32 %v526, 7
        %v528 = vsub.s32 0, %v527
        %v529 = vrot.slane %v524, %v528
        %v530 = vlaneseq
        %v531 = vshrl.u32 %v530, 7
        %v532 = vsub.s32 1, %v531
        %v533 = vrot.slane %v524, %v532
        %v534 = vcombine.low %v529, %v533
        %v536 = vadd.f32 %v516, %v534
        %538 = vrot.lane.b32.xlu0 %v536, 127
        %v539 = vpop.permute.xlu0 %538
        %v540 = vrot.slane %v539, 4
        %v541 = vsel %vm249, %v539, %v540
        %v543 = vmax.f32 %v499, %v541
        %v544 = vld [vmem:[%s475] sm:$0xf]
        %v545 = vunpack.c.l.bf16 %v544
        %547 = vrot.lane.b32.xlu0 %v545, 119
        %v548 = vpop.permute.xlu0 %547
        %v549 = vrot.slane %v548, 4
        %v550 = vsel %vm294, %v548, %v549
        %v552 = vadd.f32 %v523, %v550
        %v553 = vadd.f32 %v545, %v534
        %555 = vrot.lane.b32.xlu0 %v553, 119
        %v556 = vpop.permute.xlu0 %555
        %v557 = vrot.slane %v556, 4
        %v558 = vsel %vm294, %v556, %v557
        %v560 = vmax.f32 %v543, %v558
        %561 = vrot.lane.b32.xlu0 %v545, 118
        %v562 = vpop.permute.xlu0 %561
        %v563 = vrot.slane %v562, 4
        %v564 = vsel %vm339, %v562, %v563
        %v566 = vadd.f32 %v552, %v564
        %567 = vrot.lane.b32.xlu0 %v553, 118
        %v568 = vpop.permute.xlu0 %567
        %v569 = vrot.slane %v568, 4
        %v570 = vsel %vm339, %v568, %v569
        %v572 = vmax.f32 %v560, %v570
        %s573 = scalar_lea.vmem %s191, 12 [#allocation3]
        %v574 = vld [vmem:[%s573] sm:$0x3]
        %575 = vst [vmem:[#allocation2 + $0x8] sm:$0x3] %v574
        %v576 = vunpack.c.l.bf16 %v574
        %v577 = vadd.f32 %v566, %v576
        %s578 = scalar_lea.vmem %s1, 6
        %v579 = vld [vmem:[%s578] sm:$0x1]
        %v581 = vlaneseq
        %v582 = vshrl.u32 %v581, 7
        %v583 = vsub.s32 0, %v582
        %v584 = vrot.slane %v579, %v583
        %v586 = vadd.f32 %v576, %v584
        %v587 = vmax.f32 %v572, %v586
        %v588 = vld [vmem:[%s573] sm:$0xf]
        %v589 = vunpack.c.l.bf16 %v588
        %591 = vrot.lane.b32.xlu0 %v589, 127
        %v592 = vpop.permute.xlu0 %591
        %v593 = vrot.slane %v592, 4
        %v594 = vsel %vm249, %v592, %v593
        %v596 = vadd.f32 %v577, %v594
        %v597 = vld [vmem:[%s578] sm:$0x3]
        %v599 = vlaneseq
        %v600 = vshrl.u32 %v599, 7
        %v601 = vsub.s32 0, %v600
        %v602 = vrot.slane %v597, %v601
        %v603 = vlaneseq
        %v604 = vshrl.u32 %v603, 7
        %v605 = vsub.s32 1, %v604
        %v606 = vrot.slane %v597, %v605
        %v607 = vcombine.low %v602, %v606
        %v609 = vadd.f32 %v589, %v607
        %611 = vrot.lane.b32.xlu0 %v609, 127
        %v612 = vpop.permute.xlu0 %611
        %v613 = vrot.slane %v612, 4
        %v614 = vsel %vm249, %v612, %v613
        %v616 = vmax.f32 %v587, %v614
        %617 = vrot.lane.b32.xlu0 %v589, 119
        %v618 = vpop.permute.xlu0 %617
        %v619 = vrot.slane %v618, 4
        %v620 = vsel %vm294, %v618, %v619
        %v622 = vadd.f32 %v596, %v620
        %623 = vrot.lane.b32.xlu0 %v609, 119
        %v624 = vpop.permute.xlu0 %623
        %v625 = vrot.slane %v624, 4
        %v626 = vsel %vm294, %v624, %v625
        %v628 = vmax.f32 %v616, %v626
        %629 = vrot.lane.b32.xlu0 %v589, 118
        %v630 = vpop.permute.xlu0 %629
        %v631 = vrot.slane %v630, 4
        %v632 = vsel %vm339, %v630, %v631
        %v634 = vadd.f32 %v622, %v632
        %635 = vrot.lane.b32.xlu0 %v609, 118
        %v636 = vpop.permute.xlu0 %635
        %v637 = vrot.slane %v636, 4
        %v638 = vsel %vm339, %v636, %v637
        %v640 = vmax.f32 %v628, %v638
        %v641 = vmul.f32 %v634, 0.0625
        %v642 = vld [vmem:[%s2] sm:$0xf]
        %v643 = vld [vmem:[#allocation2] sm:$0xf]
        %v644 = vld [vmem:[#allocation2 + $0x4] sm:$0xf]
        %v645 = vld [vmem:[#allocation2 + $0x8] sm:$0xf]
        %v646 = vld [vmem:[#allocation2 + $0xc] sm:$0xf]
        %v647 = vld [vmem:[#allocation2 + $0x10] sm:$0x3]
        %v648 = vld [vmem:[%s3] sm:$0xff]
        %650 = vset.pattern.permute.xlu0 0
        %651 = vperm.xlu0 %650, %v648
        %v652 = vpop.permute.xlu0 %651
        %v659 = vunpack.c.l.b16 %v643
        %v660 = vunpack.c.l.b16 %v644
        %v661 = vunpack.c.l.b16 %v645
        %v662 = vunpack.c.l.b16 %v646
        %v663 = vunpack.c.l.b16 %v647
        %v664 = vpack.c.b16 %v660, %v659
        %v665 = vpack.c.b16 %v662, %v661
        %v666 = vpack.c.b16 %v663, %v663
        %vm669 = vcmask 293888
        %v671 = vsel %vm669, %v642, 0
        %vm673 = vcmask 1041408
        %v675 = vsel %vm673, %v666, 0
        %677 = vmatprep.subr.bf16.mxu0 0
        %678 = vmatpush1.bf16.msra.mxu0 0
        %679 = vmatprep.subr.bf16.mxu0 0
        %680 = vmatpush1.bf16.msra.mxu0 0
        %681 = vmatprep.subr.bf16.mxu0 0
        %682 = vmatpush1.bf16.msra.mxu0 0
        %683 = vmatprep.subr.bf16.mxu0 0
        %684 = vmatpush1.bf16.msra.mxu0 0
        %685 = vmatprep.subr.bf16.mxu0 0
        %686 = vmatpush1.bf16.msra.mxu0 0
        %687 = vmatprep.subr.bf16.mxu0 0
        %688 = vmatpush1.bf16.msra.mxu0 %v675
        %689 = vmatprep.subr.bf16.mxu0 0
        %690 = vmatpush1.bf16.msra.mxu0 %v665
        %691 = vmatprep.subr.bf16.mxu0 0
        %692 = vmatpush1.bf16.msra.mxu0 %v664
        %693 = vmatprep.subr.bf16.mxu0 0
        %694 = vmatpush2.bf16.msra.mxu0 0
        %695 = vmatprep.subr.bf16.mxu0 0
        %696 = vmatpush2.bf16.msra.mxu0 0
        %697 = vmatprep.subr.bf16.mxu0 0
        %698 = vmatpush2.bf16.msra.mxu0 0
        %699 = vmatprep.subr.bf16.mxu0 0
        %700 = vmatpush2.bf16.msra.mxu0 0
        %701 = vmatprep.subr.bf16.mxu0 0
        %702 = vmatpush2.bf16.msra.mxu0 0
        %703 = vmatprep.subr.bf16.mxu0 0
        %704 = vmatpush2.bf16.msra.mxu0 0
        %705 = vmatprep.subr.bf16.mxu0 0
        %706 = vmatpush2.bf16.msra.mxu0 0
        %707 = vmatprep.subr.bf16.mxu0 0
        %708 = vmatpush2.bf16.msra.mxu0 0
        %709 = vmatprep.mubr.bf16.mxu0 0
        %710 = vmatmul.mubr.bf16.gmra.mxu0 %v671
        %v711 = vpop.f32.mrf.mxu0
        %v712 = vadd.f32 %v652, %v711
        %v713 = vpop.f32.mrf.mxu0
        %v714 = vpop.f32.mrf.mxu0
        %v715 = vpop.f32.mrf.mxu0
        %716 = vdwg.mxu0
        %v717 = vsub.f32 0.0, %v712
        %v718 = vmul.f32 %v717, 1.442695
        %v719 = vpow.pop %v718
        %v720 = vadd.f32 %v719, 1.0
        %v721 = vrcp.pop %v720
        %v722 = vmul.f32 %v712, %v721
        %v724 = vcombine.low %v640, %v640
        %vm726 = vcmask 1043456
        %v727 = vsel %vm726, %v641, %v724
        %v728 = vadd.f32 %v722, %v727
        %729 = vst [vmem:[%s215] sm:$0xff] %v728
        %s730 = sand.u32 %s118, 1
        %s731 = scalar_lea.sflag [#allocation5], %s730
        %s732 = sand.u32 %s118, 1
        %s733 = smul.addr %s732, 8
        %s734 = scalar_lea.vmem [#allocation6], %s733
        // Predicated region
        $region41: #{tpu_custom_call.1} parent=35 // pred_check
          %p735 = pneg %p128
        $region42: #{tpu_custom_call.1} parent=35 // pred_check_branch
          %737 = sbr.rel (%p735) target = $region44
        $region43: #{tpu_custom_call.1} parent=35 // pred_region
          %s739 = ssub.s32 128, 128
          %740 = vsyncadd %s731, %s739
          %s741 = smul.addr %s21, 128
          %s742 = scalar_lea.hbm %s4, %s741
          %s744 = sshll.u32 %s734, 4
          %s745 = int_to_ptr.vmem [resolvable:$true] %s744
          %747 = dma.vmem_to_hbm [thread:$0]  %s745, 128, %s742, %s731
        $region44: #{tpu_custom_call.1} parent=35 // pred_fallthru
          _
      $region36: #{tpu_custom_call.1} parent=5 // pred_fallthru
        _
      %p748 = scmp.le.s32.totalorder 2, %s16
      // Predicated region
      $region45: #{tpu_custom_call.1} parent=5 // pred_check
        %p749 = pneg %p748
      $region46: #{tpu_custom_call.1} parent=5 // pred_check_branch
        %751 = sbr.rel (%p749) target = $region48
      $region47: #{tpu_custom_call.1} parent=5 // pred_region
        %s752 = ssub.s32 %s16, 2
        // Predicated region
        $region49: #{tpu_custom_call.1} parent=47 // pred_check
          %p753 = pneg %p134
        $region50: #{tpu_custom_call.1} parent=47 // pred_check_branch
          %755 = sbr.rel (%p753) target = $region52
        $region51: #{tpu_custom_call.1} parent=47 // pred_region
          %s756 = sand.u32 %s119, 1
          %s757 = scalar_lea.sflag [#allocation5], %s756
          %s758 = sand.u32 %s119, 1
          %s759 = smul.addr %s758, 8
          %s760 = scalar_lea.vmem [#allocation6], %s759
          %761 = dma.done %s757, 128
        $region52: #{tpu_custom_call.1} parent=47 // pred_fallthru
          _
      $region48: #{tpu_custom_call.1} parent=5 // pred_fallthru
        _
    $region6: #{tpu_custom_call.1} parent=1 // loop_footer
      %s20 = sadd.s32 1, %s16
    $region7: #{tpu_custom_call.1} parent=1 // loop_footer_branch
      %15 = sbr.rel target = $region3
    $region8: #{tpu_custom_call.1} parent=1 // loop_exit
      _
    %762 = vsyncpa [#allocation4], 1
    %s763 = scalar_lea.sflag [#allocation4], 1
    %764 = vsyncpa %s763, 1
    %765 = vsyncpa [#allocation5], 1
    %s766 = scalar_lea.sflag [#allocation5], 1
    %767 = vsyncpa %s766, 1

</llo_original>
